<compile_context>
chip_gen: v7x
topology: tpu7x:2x2x1
jax: 0.10.0
libtpu: 0.0.40
codegen_flags: <defaults>
</compile_context>

<pallas_src>
import functools
import math

import jax
import jax.numpy as jnp
from jax.experimental import pallas as pl
from jax.experimental.pallas import tpu as pltpu


_TARGET_TILE_BYTES = 8 << 20     # ~8 MiB input tiles: >=85% of HBM roofline
_FAST_PATH_MAX_ROWS = 1024       # below this, plain XLA beats launch overhead


def _scalarize_mean_kernel(x_ref, w_ref, o_ref, *, offset, num_passes):
    # x_ref: (TMB, 128*O) in the samples' native dtype.
    # w_ref: (num_passes, 128*O, 128) comb matrix (f32 for f32 inputs,
    #        hi/lo split in the input dtype for bf16/f16 inputs).
    # o_ref: (TMB, 128) output dtype.
    # No up-cast of the input tile: native-dtype MXU passes, f32 accumulation.
    x = x_ref[...]
    acc = jnp.dot(x, w_ref[0], preferred_element_type=jnp.float32)
    for p in range(1, num_passes):
        acc = acc + jnp.dot(x, w_ref[p], preferred_element_type=jnp.float32)
    if offset != 0.0:
        acc = acc + offset
    o_ref[...] = acc.astype(o_ref.dtype)


def _vmem_budget_bytes() -> int:
    """Generation-aware VMEM budget for 2x(in+out) tiles + 2x comb."""
    cap = 64 << 20  # conservative fallback (v7x physical VMEM)
    try:
        cap = int(getattr(pltpu.get_tpu_info(), "vmem_capacity_bytes", cap))
    except Exception:
        pass
    # leave ~16 MiB headroom; cap at 96 MiB even on 128 MiB parts.
    return max(24 << 20, min(cap - (16 << 20), 96 << 20))


def _round_down(x: int, m: int) -> int:
    return max(m, (x // m) * m)


def _choose_tile_blocks(n_b, in_block_bytes, out_block_bytes, comb_bytes,
                        itemsize, tile_blocks, vmem_budget):
    """Pick #(128-row blocks) per grid step.

    Targets ~8 MiB input tiles, keeps 2x(in+out) tiles + double-buffered comb
    under the VMEM budget, aligns to the sublane pack of the input dtype, and
    keeps >=2 grid steps when there is enough work so the 'parallel' axis can
    shard across v7x's two TensorCores.
    """
    align = 8 * max(1, 4 // max(int(itemsize), 1))   # 8 f32 / 16 bf16 / 32 i8
    if tile_blocks is not None:
        tmb = int(tile_blocks)
        return n_b if tmb >= n_b else _round_down(tmb, align)
    per_block = 2 * (in_block_bytes + out_block_bytes)   # double-buffered
    avail = vmem_budget - 2 * comb_bytes - (2 << 20)
    tmb = min(max(align, avail // per_block),
              max(align, _TARGET_TILE_BYTES // max(in_block_bytes, 1)))
    if tmb >= n_b:
        total_in_bytes = n_b * in_block_bytes
        if total_in_bytes >= (8 << 20) and n_b >= 2 * align:
            # enough work: split so both v7x TensorCores get a share.
            return _round_down(pl.cdiv(n_b, 2), align)
        return n_b       # single full block == full dim (always legal)
    return _round_down(int(tmb), align)


def scalarize_mean(samples, weights, *, offset: float = 0.0, tile_blocks=None,
                   min_kernel_rows: int = _FAST_PATH_MAX_ROWS):
    """offset + sum_o weights[o] * samples[..., o], reduced over the last dim.

    samples: `... x o` array.   weights: `(o,)` array.   Returns `...` array.
    """
    samples = jnp.asarray(samples)
    weights = jnp.asarray(weights)
    if weights.ndim != 1:
        raise ValueError("weights must be a one-dimensional tensor.")
    if samples.shape[-1] != weights.shape[0]:
        raise RuntimeError("Output shape of samples not equal to that of weights")

    lead_shape = samples.shape[:-1]
    o = samples.shape[-1]
    n = math.prod(lead_shape) if lead_shape else 1
    out_dtype = jnp.result_type(samples.dtype, weights.dtype)
    w32 = weights.astype(jnp.float32)
    offset = float(offset)

    x2d = samples.reshape(n, o)

    # Small-N fast path: kernel launch + comb construction dwarfs the work.
    if n < max(128, int(min_kernel_rows)):
        out = jnp.sum(x2d.astype(jnp.float32) * w32[None, :], axis=-1) + offset
        return out.astype(out_dtype).reshape(lead_shape)

    # Ragged row counts: run the zero-copy lane-dense kernel on the first
    # (n//128)*128 rows; finish the <128-row tail with a tiny XLA reduction.
    n_main = (n // 128) * 128
    tail_out = None
    if n_main != n:
        x_tail = x2d[n_main:]
        tail_out = (jnp.sum(x_tail.astype(jnp.float32) * w32[None, :], axis=-1)
                    + offset).astype(out_dtype)
        x2d = x2d[:n_main]

    # Comb weight matrix: comb32[r*o + k, r] = weights[k]  (zero elsewhere).
    comb32 = (jnp.eye(128, dtype=jnp.float32)[:, None, :] * w32[None, :, None])
    comb32 = comb32.reshape(128 * o, 128)

    in_dtype = jnp.dtype(samples.dtype)
    if jnp.issubdtype(in_dtype, jnp.floating) and in_dtype.itemsize < 4:
        # Sub-32-bit float inputs: hi/lo split of the f32 comb in the input
        # dtype -> 2 native MXU passes, ~f32 weight precision, no up-cast.
        c_hi = comb32.astype(in_dtype)
        c_lo = (comb32 - c_hi.astype(jnp.float32)).astype(in_dtype)
        combs = jnp.stack([c_hi, c_lo])
        x_main = x2d
    else:
        # f32 (and anything else, cast once) at full f32 matmul precision.
        combs = comb32[None]
        x_main = x2d if in_dtype == jnp.dtype(jnp.float32) else x2d.astype(jnp.float32)
    num_passes = int(combs.shape[0])

    n_b = n_main // 128
    x3 = x_main.reshape(n_b, 128 * o)          # contiguous -> zero-cost reshape

    itemsize = jnp.dtype(x_main.dtype).itemsize
    in_block_bytes = 128 * o * itemsize
    out_block_bytes = 128 * jnp.dtype(out_dtype).itemsize
    comb_bytes = num_passes * 128 * o * 128 * jnp.dtype(combs.dtype).itemsize

    vmem_budget = _vmem_budget_bytes()
    tmb = _choose_tile_blocks(n_b, in_block_bytes, out_block_bytes, comb_bytes,
                              itemsize, tile_blocks, vmem_budget)
    grid = (pl.cdiv(n_b, tmb),)                # partial last block is fine

    needed = 2 * tmb * (in_block_bytes + out_block_bytes) + 2 * comb_bytes + (2 << 20)
    vmem_limit = int(min(max(needed, 32 << 20), vmem_budget))
    vmem_limit = int(max(vmem_limit, needed))

    out2d = pl.pallas_call(
        functools.partial(_scalarize_mean_kernel, offset=offset,
                          num_passes=num_passes),
        out_shape=jax.ShapeDtypeStruct((n_b, 128), out_dtype),
        grid_spec=pltpu.PrefetchScalarGridSpec(
            num_scalar_prefetch=0,
            grid=grid,
            in_specs=[
                pl.BlockSpec((tmb, 128 * o), lambda i: (i, 0)),          # samples
                pl.BlockSpec((num_passes, 128 * o, 128),
                             lambda i: (0, 0, 0)),                       # resident comb
            ],
            out_specs=pl.BlockSpec((tmb, 128), lambda i: (i, 0)),
        ),
        compiler_params=pltpu.CompilerParams(
            dimension_semantics=("parallel",),
            vmem_limit_bytes=vmem_limit),
    )(x3, combs)

    out = out2d.reshape(n_main)
    if tail_out is not None:
        out = jnp.concatenate([out, tail_out])
    return out.reshape(lead_shape)


def scalarize_covariance(covariance, weights, *, tile_blocks=None,
                         min_kernel_rows: int = _FAST_PATH_MAX_ROWS):
    """weights^T Sigma weights for covariance of shape `... x o x o` (q=1)."""
    covariance = jnp.asarray(covariance)
    weights = jnp.asarray(weights)
    o = weights.shape[0]
    if covariance.shape[-1] != o or covariance.shape[-2] != o:
        raise RuntimeError("covariance trailing dims must be (o, o)")
    if o >= 8:
        # Two stages: v = Sigma @ w, then w . v.  Keeps the comb O(o), not
        # O(o^2), and cuts MXU flops by ~o for only ~2/o extra HBM traffic.
        v = scalarize_mean(covariance, weights, offset=0.0,
                           tile_blocks=tile_blocks,
                           min_kernel_rows=min_kernel_rows)
        return scalarize_mean(v, weights, offset=0.0,
                              tile_blocks=tile_blocks,
                              min_kernel_rows=min_kernel_rows)
    w_outer = (weights[:, None] * weights[None, :]).reshape(o * o)
    flat = covariance.reshape(covariance.shape[:-2] + (o * o,))
    return scalarize_mean(flat, w_outer, offset=0.0, tile_blocks=tile_blocks,
                          min_kernel_rows=min_kernel_rows)


def scalarized_objective(mean, covariance, weights, offset: float = 0.0):
    """Pallas equivalent of ScalarizedObjective.forward for the q=1 analytic
    case: returns (scalarized posterior mean, scalarized posterior variance)."""
    new_mean = scalarize_mean(mean, weights, offset=offset)
    new_var = scalarize_covariance(covariance, weights)
    return new_mean, new_var


if __name__ == "__main__":
    key = jax.random.PRNGKey(0)
    ks = jax.random.split(key, 8)

    weights = jnp.array([0.75, 0.25, 0.5, -0.1], dtype=jnp.float32)
    offset = 0.3

    def ref_scalarize(s, w, off=0.0):
        return off + jnp.sum(s.astype(jnp.float32) * w.astype(jnp.float32), axis=-1)

    # 1) Lane-dense kernel path, row count an exact multiple of 128
    #    (zero-copy reshape), kernel forced via min_kernel_rows=0.
    s1 = jax.random.normal(ks[0], (4, 2, 16, 4), dtype=jnp.float32)
    out1 = jax.block_until_ready(
        scalarize_mean(s1, weights, offset=offset, min_kernel_rows=0))
    assert out1.shape == (4, 2, 16), out1.shape
    assert jnp.allclose(out1, ref_scalarize(s1, weights, offset), atol=1e-5, rtol=1e-5)

    # 2) bf16 samples with a ragged row count (n=210): hi/lo native-dtype comb
    #    passes in the kernel for the first 128 rows + XLA tail for the rest.
    w5 = jnp.array([0.2, -0.4, 0.1, 0.7, 0.35], dtype=jnp.float32)
    s2 = jax.random.normal(ks[1], (3, 70, 5), dtype=jnp.bfloat16)
    out2 = jax.block_until_ready(scalarize_mean(s2, w5, min_kernel_rows=0))
    assert out2.dtype == jnp.float32
    assert jnp.allclose(out2, ref_scalarize(s2, w5), atol=2e-4, rtol=2e-4)

    # 3) Multi-step grid with a partial last block (n_b=20, 8 blocks/step);
    #    large enough (2560 rows) to take the kernel path by default.
    s3 = jax.random.normal(ks[2], (5, 4, 128, 4), dtype=jnp.float32)
    out3 = jax.block_until_ready(scalarize_mean(s3, weights, tile_blocks=8))
    assert jnp.allclose(out3, ref_scalarize(s3, weights), atol=1e-5, rtol=1e-5)

    # 4) Full q=1 posterior scalarization: mean and variance (small-N fast path).
    mu = jax.random.normal(ks[3], (2, 1, 4), dtype=jnp.float32)
    a = jax.random.normal(ks[4], (2, 4, 4), dtype=jnp.float32)
    sigma = jnp.einsum("bij,bkj->bik", a, a) + 0.1 * jnp.eye(4, dtype=jnp.float32)
    new_mean, new_var = scalarized_objective(mu, sigma, weights, offset=offset)
    jax.block_until_ready((new_mean, new_var))
    ref_mean = offset + jnp.sum(mu * weights, axis=-1)
    ref_var = jnp.sum(jnp.sum(sigma * weights[None, None, :], axis=-1)
                      * weights[None, :], axis=-1)
    assert jnp.allclose(new_mean, ref_mean, atol=1e-5, rtol=1e-5)
    assert jnp.allclose(new_var, ref_var, atol=1e-4, rtol=1e-4)

    # 5) Two-stage covariance scalarization path (o >= 8).
    w8 = jax.random.normal(ks[5], (8,), dtype=jnp.float32) * 0.5
    a8 = jax.random.normal(ks[6], (2, 8, 8), dtype=jnp.float32)
    sigma8 = jnp.einsum("bij,bkj->bik", a8, a8) + 0.1 * jnp.eye(8, dtype=jnp.float32)
    var8 = jax.block_until_ready(scalarize_covariance(sigma8, w8))
    ref8 = jnp.sum(jnp.sum(sigma8 * w8[None, None, :], axis=-1) * w8[None, :], axis=-1)
    assert jnp.allclose(var8, ref8, atol=1e-4, rtol=1e-4)

    print("KERNEL_OK")
</pallas_src>

<mosaic_0001>
module attributes {stable_mosaic.version = 11 : i64} {
  func.func @_scalarize_mean_kernel(%arg0: i32, %arg1: memref<1x512xf32, #tpu.memory_space<vmem>>, %arg2: memref<1x512x128xf32, #tpu.memory_space<vmem>>, %arg3: memref<1x128xf32, #tpu.memory_space<vmem>>) attributes {dimension_semantics = [#tpu.dimension_semantics<parallel>], iteration_bounds = array<i64: 1>, scalar_prefetch = 0 : i64, scratch_operands = 0 : i64, tpu.core_type = #tpu.core_type<tc>, window_params = [{transform_indices = @transform_0, window_bounds = array<i64: 1, 512>}, {pipeline_mode = #tpu.pipeline_mode<synchronous>, transform_indices = @transform_1, window_bounds = array<i64: 1, 512, 128>}, {transform_indices = @transform_2, window_bounds = array<i64: 1, 128>}]} {
    %c0 = arith.constant 0 : index
    %c0_0 = arith.constant 0 : index
    %0 = vector.load %arg1[%c0, %c0_0] : memref<1x512xf32, #tpu.memory_space<vmem>>, vector<1x512xf32>
    %c0_1 = arith.constant 0 : index
    %c0_2 = arith.constant 0 : index
    %c0_3 = arith.constant 0 : index
    %1 = vector.load %arg2[%c0_1, %c0_2, %c0_3] : memref<1x512x128xf32, #tpu.memory_space<vmem>>, vector<1x512x128xf32>
    %2 = vector.shape_cast %1 : vector<1x512x128xf32> to vector<512x128xf32>
    %cst = arith.constant dense<0.000000e+00> : vector<1x128xf32>
    %3 = tpu.matmul %0, %2, %cst {dimension_numbers = #tpu.dot_dimension_numbers<[1], [0], [0], [1], [0, 0, 1, 1], [], []>} : vector<1x512xf32>, vector<512x128xf32>, vector<1x128xf32> -> vector<1x128xf32>
    %cst_4 = arith.constant 3.000000e-01 : f32
    %4 = vector.broadcast %cst_4 : f32 to vector<1x128xf32>
    %5 = arith.addf %3, %4 : vector<1x128xf32>
    %c0_5 = arith.constant 0 : index
    %c0_6 = arith.constant 0 : index
    %6 = vector.load %arg3[%c0_5, %c0_6] : memref<1x128xf32, #tpu.memory_space<vmem>>, vector<1x128xf32>
    tpu.vector_store %arg3[%c0_5, %c0_6], %5 {strides = array<i32>} : memref<1x128xf32, #tpu.memory_space<vmem>>, vector<1x128xf32>,
    return
  }
  func.func @transform_0(%arg0: i32) -> (i32, i32) {
    %c0_i32 = arith.constant 0 : i32
    %c0_i32_0 = arith.constant 0 : i32
    return %arg0, %c0_i32 : i32, i32
  }
  func.func @transform_1(%arg0: i32) -> (i32, i32, i32) {
    %c0_i32 = arith.constant 0 : i32
    %c0_i32_0 = arith.constant 0 : i32
    %c0_i32_1 = arith.constant 0 : i32
    %c0_i32_2 = arith.constant 0 : i32
    return %c0_i32, %c0_i32_0, %c0_i32_1 : i32, i32, i32
  }
  func.func @transform_2(%arg0: i32) -> (i32, i32) {
    %c0_i32 = arith.constant 0 : i32
    %c0_i32_0 = arith.constant 0 : i32
    return %arg0, %c0_i32 : i32, i32
  }
}

</mosaic_0001>

<llo_original>
// kernel: tpu_custom_call.1
$region0: #{tpu_custom_call.1}
  #allocation0 [shape = 'u32[]', space=smem, size = 0x4, offset = 0x4, fixed_abs, tag = 'smem constant byte address 0x4 - core index']
  #allocation1 [shape = 'u32[144,128]{1,0:T(1,128)}', space=vmem, size = 0x12000, scoped, tag = 'internal scratch']
  %s0 = inlined_call_operand.hbm [shape: f32[1,512], index: 0, kind: input, shape index: {}]
  %s1 = inlined_call_operand.hbm [shape: f32[1,512,128], index: 1, kind: input, shape index: {}]
  %s2 = inlined_call_operand.hbm [shape: f32[1,128], index: 2, kind: output, shape index: {}]
  %s3 = sld [smem:[#allocation0]]
  $region26: #{tpu_custom_call.1} parent=0
    _
  %s5 = ssub.s32 1, %s3
  %s6 = scalar_select 0, %s5, %s3
  $region1: #{tpu_custom_call.1} parent=0
    #allocation2 [shape = 'u8[2048]{0}', space=vmem, size = 0x800, scoped, tag = 'input window, operand 0, single buffered']
    #allocation3 [shape = 's32[1]{0}', space=sflag, size = 0x4, scoped, tag = 'scoped memory for tpu_custom_call.1']
    #allocation4 [shape = 's32[1]{0}', space=sflag, size = 0x4, scoped, tag = 'scoped memory for tpu_custom_call.1']
    #allocation5 [shape = 'u8[262144]{0}', space=vmem, size = 0x40000, scoped, tag = 'input window, operand 1, single buffered']
    #allocation6 [shape = 's32[1]{0}', space=sflag, size = 0x4, scoped, tag = 'scoped memory for tpu_custom_call.1']
    #allocation7 [shape = 'u8[512]{0}', space=vmem, size = 0x400, scoped, tag = 'output window, operand 0, single buffered']
    %7 = vsyncpa [#allocation3], 0
    %8 = vsyncpa [#allocation6], 0
    %9 = vsyncpa [#allocation4], 0
    // Predicated region
    $region2: #{tpu_custom_call.1} parent=1 // pred_check
      _
    $region3: #{tpu_custom_call.1} parent=1 // pred_check_branch
      %11 = sbr.rel (0) target = $region5
    $region4: #{tpu_custom_call.1} parent=1 // pred_region
      %s13 = ssub.s32 64, 64
      %14 = vsyncadd [#allocation3], %s13
      %s16 = sshll.u32 [#allocation2], 4
      %s17 = int_to_ptr.vmem [resolvable:$true] %s16
      %19 = dma.hbm_to_vmem [thread:$0]  %s0, 64, %s17, [#allocation3]
    $region5: #{tpu_custom_call.1} parent=1 // pred_fallthru
      _
    // Predicated region
    $region6: #{tpu_custom_call.1} parent=1 // pred_check
      _
    $region7: #{tpu_custom_call.1} parent=1 // pred_check_branch
      %21 = sbr.rel (0) target = $region9
    $region8: #{tpu_custom_call.1} parent=1 // pred_region
      %s23 = ssub.s32 8192, 8192
      %24 = vsyncadd [#allocation6], %s23
      %s25 = sshll.u32 [#allocation5], 4
      %s26 = int_to_ptr.vmem [resolvable:$true] %s25
      %31 = dma.hbm_to_vmem [thread:$0]  %s1, 8192, %s26, [#allocation6], 128, 128, 8
    $region9: #{tpu_custom_call.1} parent=1 // pred_fallthru
      _
    // Predicated region
    $region10: #{tpu_custom_call.1} parent=1 // pred_check
      _
    $region11: #{tpu_custom_call.1} parent=1 // pred_check_branch
      %33 = sbr.rel (0) target = $region13
    $region12: #{tpu_custom_call.1} parent=1 // pred_region
      %34 = dma.done [#allocation3], 64
    $region13: #{tpu_custom_call.1} parent=1 // pred_fallthru
      _
    // Predicated region
    $region14: #{tpu_custom_call.1} parent=1 // pred_check
      _
    $region15: #{tpu_custom_call.1} parent=1 // pred_check_branch
      %36 = sbr.rel (0) target = $region17
    $region16: #{tpu_custom_call.1} parent=1 // pred_region
      %37 = dma.done [#allocation6], 8192
    $region17: #{tpu_custom_call.1} parent=1 // pred_fallthru
      _
    %v38 = vld [vmem:[#allocation2] sm:$0xf]
    %v39 = vld [vmem:[#allocation5] sm:$0xff]
    %v40 = vld [vmem:[#allocation5 + $0x8] sm:$0xff]
    %v41 = vld [vmem:[#allocation5 + $0x10] sm:$0xff]
    %v42 = vld [vmem:[#allocation5 + $0x18] sm:$0xff]
    %v43 = vld [vmem:[#allocation5 + $0x20] sm:$0xff]
    %v44 = vld [vmem:[#allocation5 + $0x28] sm:$0xff]
    %v45 = vld [vmem:[#allocation5 + $0x30] sm:$0xff]
    %v46 = vld [vmem:[#allocation5 + $0x38] sm:$0xff]
    %v47 = vld [vmem:[#allocation5 + $0x40] sm:$0xff]
    %v48 = vld [vmem:[#allocation5 + $0x48] sm:$0xff]
    %v49 = vld [vmem:[#allocation5 + $0x50] sm:$0xff]
    %v50 = vld [vmem:[#allocation5 + $0x58] sm:$0xff]
    %v51 = vld [vmem:[#allocation5 + $0x60] sm:$0xff]
    %v52 = vld [vmem:[#allocation5 + $0x68] sm:$0xff]
    %v53 = vld [vmem:[#allocation5 + $0x70] sm:$0xff]
    %v54 = vld [vmem:[#allocation5 + $0x78] sm:$0xff]
    %v55 = vld [vmem:[#allocation5 + $0x80] sm:$0xff]
    %v56 = vld [vmem:[#allocation5 + $0x88] sm:$0xff]
    %v57 = vld [vmem:[#allocation5 + $0x90] sm:$0xff]
    %v58 = vld [vmem:[#allocation5 + $0x98] sm:$0xff]
    %v59 = vld [vmem:[#allocation5 + $0xa0] sm:$0xff]
    %v60 = vld [vmem:[#allocation5 + $0xa8] sm:$0xff]
    %v61 = vld [vmem:[#allocation5 + $0xb0] sm:$0xff]
    %v62 = vld [vmem:[#allocation5 + $0xb8] sm:$0xff]
    %v63 = vld [vmem:[#allocation5 + $0xc0] sm:$0xff]
    %v64 = vld [vmem:[#allocation5 + $0xc8] sm:$0xff]
    %v65 = vld [vmem:[#allocation5 + $0xd0] sm:$0xff]
    %v66 = vld [vmem:[#allocation5 + $0xd8] sm:$0xff]
    %v67 = vld [vmem:[#allocation5 + $0xe0] sm:$0xff]
    %v68 = vld [vmem:[#allocation5 + $0xe8] sm:$0xff]
    %v69 = vld [vmem:[#allocation5 + $0xf0] sm:$0xff]
    %v70 = vld [vmem:[#allocation5 + $0xf8] sm:$0xff]
    %v71 = vld [vmem:[#allocation5 + $0x100] sm:$0xff]
    %v72 = vld [vmem:[#allocation5 + $0x108] sm:$0xff]
    %v73 = vld [vmem:[#allocation5 + $0x110] sm:$0xff]
    %v74 = vld [vmem:[#allocation5 + $0x118] sm:$0xff]
    %v75 = vld [vmem:[#allocation5 + $0x120] sm:$0xff]
    %v76 = vld [vmem:[#allocation5 + $0x128] sm:$0xff]
    %v77 = vld [vmem:[#allocation5 + $0x130] sm:$0xff]
    %v78 = vld [vmem:[#allocation5 + $0x138] sm:$0xff]
    %v79 = vld [vmem:[#allocation5 + $0x140] sm:$0xff]
    %v80 = vld [vmem:[#allocation5 + $0x148] sm:$0xff]
    %v81 = vld [vmem:[#allocation5 + $0x150] sm:$0xff]
    %v82 = vld [vmem:[#allocation5 + $0x158] sm:$0xff]
    %v83 = vld [vmem:[#allocation5 + $0x160] sm:$0xff]
    %v84 = vld [vmem:[#allocation5 + $0x168] sm:$0xff]
    %v85 = vld [vmem:[#allocation5 + $0x170] sm:$0xff]
    %v86 = vld [vmem:[#allocation5 + $0x178] sm:$0xff]
    %v87 = vld [vmem:[#allocation5 + $0x180] sm:$0xff]
    %v88 = vld [vmem:[#allocation5 + $0x188] sm:$0xff]
    %v89 = vld [vmem:[#allocation5 + $0x190] sm:$0xff]
    %v90 = vld [vmem:[#allocation5 + $0x198] sm:$0xff]
    %v91 = vld [vmem:[#allocation5 + $0x1a0] sm:$0xff]
    %v92 = vld [vmem:[#allocation5 + $0x1a8] sm:$0xff]
    %v93 = vld [vmem:[#allocation5 + $0x1b0] sm:$0xff]
    %v94 = vld [vmem:[#allocation5 + $0x1b8] sm:$0xff]
    %v95 = vld [vmem:[#allocation5 + $0x1c0] sm:$0xff]
    %v96 = vld [vmem:[#allocation5 + $0x1c8] sm:$0xff]
    %v97 = vld [vmem:[#allocation5 + $0x1d0] sm:$0xff]
    %v98 = vld [vmem:[#allocation5 + $0x1d8] sm:$0xff]
    %v99 = vld [vmem:[#allocation5 + $0x1e0] sm:$0xff]
    %v100 = vld [vmem:[#allocation5 + $0x1e8] sm:$0xff]
    %v101 = vld [vmem:[#allocation5 + $0x1f0] sm:$0xff]
    %v102 = vld [vmem:[#allocation5 + $0x1f8] sm:$0xff]
    %v104 = vlaneseq
    %v105 = vshrl.u32 %v104, 7
    %v106 = vsub.s32 0, %v105
    %v107 = vrot.slane %v38, %v106
    %v108 = vlaneseq
    %v109 = vshrl.u32 %v108, 7
    %v110 = vsub.s32 1, %v109
    %v111 = vrot.slane %v38, %v110
    %v112 = vlaneseq
    %v113 = vshrl.u32 %v112, 7
    %v114 = vsub.s32 2, %v113
    %v115 = vrot.slane %v38, %v114
    %v116 = vlaneseq
    %v117 = vshrl.u32 %v116, 7
    %v118 = vsub.s32 3, %v117
    %v119 = vrot.slane %v38, %v118
    %124 = vmatprep.subr.mxu0 0.0
    %125 = vmatpush1.msra.mxu0 %v39
    %126 = vmatprep.subr.mxu0 0.0
    %127 = vmatpush1.msra.mxu0 %v40
    %128 = vmatprep.subr.mxu0 0.0
    %129 = vmatpush1.msra.mxu0 %v41
    %130 = vmatprep.subr.mxu0 0.0
    %131 = vmatpush1.msra.mxu0 %v42
    %132 = vmatprep.subr.mxu0 0.0
    %133 = vmatpush1.msra.mxu0 %v43
    %134 = vmatprep.subr.mxu0 0.0
    %135 = vmatpush1.msra.mxu0 %v44
    %136 = vmatprep.subr.mxu0 0.0
    %137 = vmatpush1.msra.mxu0 %v45
    %138 = vmatprep.subr.mxu0 0.0
    %139 = vmatpush1.msra.mxu0 %v46
    %140 = vmatprep.subr.mxu0 0.0
    %141 = vmatpush1.msra.mxu0 %v47
    %142 = vmatprep.subr.mxu0 0.0
    %143 = vmatpush1.msra.mxu0 %v48
    %144 = vmatprep.subr.mxu0 0.0
    %145 = vmatpush1.msra.mxu0 %v49
    %146 = vmatprep.subr.mxu0 0.0
    %147 = vmatpush1.msra.mxu0 %v50
    %148 = vmatprep.subr.mxu0 0.0
    %149 = vmatpush1.msra.mxu0 %v51
    %150 = vmatprep.subr.mxu0 0.0
    %151 = vmatpush1.msra.mxu0 %v52
    %152 = vmatprep.subr.mxu0 0.0
    %153 = vmatpush1.msra.mxu0 %v53
    %154 = vmatprep.subr.mxu0 0.0
    %155 = vmatpush1.msra.mxu0 %v54
    %156 = vmatprep.subr.mxu0 0.0
    %157 = vmatpush1.msra.mxu0 %v55
    %158 = vmatprep.subr.mxu0 0.0
    %159 = vmatpush1.msra.mxu0 %v56
    %160 = vmatprep.subr.mxu0 0.0
    %161 = vmatpush1.msra.mxu0 %v57
    %162 = vmatprep.subr.mxu0 0.0
    %163 = vmatpush1.msra.mxu0 %v58
    %164 = vmatprep.subr.mxu0 0.0
    %165 = vmatpush1.msra.mxu0 %v59
    %166 = vmatprep.subr.mxu0 0.0
    %167 = vmatpush1.msra.mxu0 %v60
    %168 = vmatprep.subr.mxu0 0.0
    %169 = vmatpush1.msra.mxu0 %v61
    %170 = vmatprep.subr.mxu0 0.0
    %171 = vmatpush1.msra.mxu0 %v62
    %172 = vmatprep.subr.mxu0 0.0
    %173 = vmatpush1.msra.mxu0 %v63
    %174 = vmatprep.subr.mxu0 0.0
    %175 = vmatpush1.msra.mxu0 %v64
    %176 = vmatprep.subr.mxu0 0.0
    %177 = vmatpush1.msra.mxu0 %v65
    %178 = vmatprep.subr.mxu0 0.0
    %179 = vmatpush1.msra.mxu0 %v66
    %180 = vmatprep.subr.mxu0 0.0
    %181 = vmatpush1.msra.mxu0 %v67
    %182 = vmatprep.subr.mxu0 0.0
    %183 = vmatpush1.msra.mxu0 %v68
    %184 = vmatprep.subr.mxu0 0.0
    %185 = vmatpush1.msra.mxu0 %v69
    %186 = vmatprep.subr.mxu0 0.0
    %187 = vmatpush1.msra.mxu0 %v70
    %188 = vmatprep.mubr.f32.mxu0 %v111
    %189 = vmatmul.mubr.f32.gmra.mrb[0].mxu0 %v107
    %v190 = vpop.f32.mrb[0].mxu0
    %v191 = vadd.f32 0.3, %v190
    %v192 = vpop.f32.mrb[0].mxu0
    %193 = vdwg.mxu0
    %194 = vmatprep.subr.mxu0 0.0
    %195 = vmatpush1.msra.mxu0 %v71
    %196 = vmatprep.subr.mxu0 0.0
    %197 = vmatpush1.msra.mxu0 %v72
    %198 = vmatprep.subr.mxu0 0.0
    %199 = vmatpush1.msra.mxu0 %v73
    %200 = vmatprep.subr.mxu0 0.0
    %201 = vmatpush1.msra.mxu0 %v74
    %202 = vmatprep.subr.mxu0 0.0
    %203 = vmatpush1.msra.mxu0 %v75
    %204 = vmatprep.subr.mxu0 0.0
    %205 = vmatpush1.msra.mxu0 %v76
    %206 = vmatprep.subr.mxu0 0.0
    %207 = vmatpush1.msra.mxu0 %v77
    %208 = vmatprep.subr.mxu0 0.0
    %209 = vmatpush1.msra.mxu0 %v78
    %210 = vmatprep.subr.mxu0 0.0
    %211 = vmatpush1.msra.mxu0 %v79
    %212 = vmatprep.subr.mxu0 0.0
    %213 = vmatpush1.msra.mxu0 %v80
    %214 = vmatprep.subr.mxu0 0.0
    %215 = vmatpush1.msra.mxu0 %v81
    %216 = vmatprep.subr.mxu0 0.0
    %217 = vmatpush1.msra.mxu0 %v82
    %218 = vmatprep.subr.mxu0 0.0
    %219 = vmatpush1.msra.mxu0 %v83
    %220 = vmatprep.subr.mxu0 0.0
    %221 = vmatpush1.msra.mxu0 %v84
    %222 = vmatprep.subr.mxu0 0.0
    %223 = vmatpush1.msra.mxu0 %v85
    %224 = vmatprep.subr.mxu0 0.0
    %225 = vmatpush1.msra.mxu0 %v86
    %226 = vmatprep.subr.mxu0 0.0
    %227 = vmatpush1.msra.mxu0 %v87
    %228 = vmatprep.subr.mxu0 0.0
    %229 = vmatpush1.msra.mxu0 %v88
    %230 = vmatprep.subr.mxu0 0.0
    %231 = vmatpush1.msra.mxu0 %v89
    %232 = vmatprep.subr.mxu0 0.0
    %233 = vmatpush1.msra.mxu0 %v90
    %234 = vmatprep.subr.mxu0 0.0
    %235 = vmatpush1.msra.mxu0 %v91
    %236 = vmatprep.subr.mxu0 0.0
    %237 = vmatpush1.msra.mxu0 %v92
    %238 = vmatprep.subr.mxu0 0.0
    %239 = vmatpush1.msra.mxu0 %v93
    %240 = vmatprep.subr.mxu0 0.0
    %241 = vmatpush1.msra.mxu0 %v94
    %242 = vmatprep.subr.mxu0 0.0
    %243 = vmatpush1.msra.mxu0 %v95
    %244 = vmatprep.subr.mxu0 0.0
    %245 = vmatpush1.msra.mxu0 %v96
    %246 = vmatprep.subr.mxu0 0.0
    %247 = vmatpush1.msra.mxu0 %v97
    %248 = vmatprep.subr.mxu0 0.0
    %249 = vmatpush1.msra.mxu0 %v98
    %250 = vmatprep.subr.mxu0 0.0
    %251 = vmatpush1.msra.mxu0 %v99
    %252 = vmatprep.subr.mxu0 0.0
    %253 = vmatpush1.msra.mxu0 %v100
    %254 = vmatprep.subr.mxu0 0.0
    %255 = vmatpush1.msra.mxu0 %v101
    %256 = vmatprep.subr.mxu0 0.0
    %257 = vmatpush1.msra.mxu0 %v102
    %258 = vmatprep.mubr.f32.mxu0 %v119
    %259 = vmatmul.mubr.f32.gmra.mrb[0].mxu0 %v115
    %v260 = vpop.f32.mrb[0].mxu0
    %v261 = vadd.f32 %v191, %v260
    %v262 = vpop.f32.mrb[0].mxu0
    %263 = vdwg.mxu0
    %264 = vst [vmem:[#allocation7] sm:$0x1] %v261
    // Predicated region
    $region18: #{tpu_custom_call.1} parent=1 // pred_check
      _
    $region19: #{tpu_custom_call.1} parent=1 // pred_check_branch
      %266 = sbr.rel (0) target = $region21
    $region20: #{tpu_custom_call.1} parent=1 // pred_region
      %s268 = ssub.s32 16, 16
      %269 = vsyncadd [#allocation4], %s268
      %s271 = sshll.u32 [#allocation7], 4
      %s272 = int_to_ptr.vmem [resolvable:$true] %s271
      %274 = dma.vmem_to_hbm [thread:$0]  %s272, 16, %s2, [#allocation4]
    $region21: #{tpu_custom_call.1} parent=1 // pred_fallthru
      _
    // Predicated region
    $region22: #{tpu_custom_call.1} parent=1 // pred_check
      _
    $region23: #{tpu_custom_call.1} parent=1 // pred_check_branch
      %276 = sbr.rel (0) target = $region25
    $region24: #{tpu_custom_call.1} parent=1 // pred_region
      %277 = dma.done [#allocation4], 16
    $region25: #{tpu_custom_call.1} parent=1 // pred_fallthru
      _
    %278 = vsyncpa [#allocation3], 1
    %279 = vsyncpa [#allocation6], 1
    %280 = vsyncpa [#allocation4], 1

</llo_original>
